<compile_context>
chip_gen: v5e
topology: v5e:2x2
jax: 0.10.0
libtpu: 0.0.40
codegen_flags: <defaults>
</compile_context>

<pallas_src>
import numpy as np
import jax
import jax.numpy as jnp
from jax.experimental import pallas as pl
from jax.experimental.pallas import tpu as pltpu


# ---------------------------------------------------------------------------
# Host-side construction of the exact pooling / upsampling operators (glue).
# ---------------------------------------------------------------------------
def _adaptive_pool_matrix(in_size: int, out_size: int) -> np.ndarray:
    """Averaging matrix reproducing nn.AdaptiveAvgPool2d windows along one axis."""
    A = np.zeros((out_size, in_size), dtype=np.float32)
    for i in range(out_size):
        start = (i * in_size) // out_size
        end = -((-(i + 1) * in_size) // out_size)  # ceil div
        A[i, start:end] = 1.0 / float(end - start)
    return A


def _bilinear_matrix(out_size: int, in_size: int) -> np.ndarray:
    """Interpolation matrix for F.interpolate(mode='bilinear', align_corners=True)."""
    U = np.zeros((out_size, in_size), dtype=np.float32)
    for h in range(out_size):
        src = 0.0 if out_size == 1 else h * (in_size - 1) / (out_size - 1)
        p0 = min(int(np.floor(src)), in_size - 1)
        p1 = min(p0 + 1, in_size - 1)
        frac = src - p0
        U[h, p0] += 1.0 - frac
        U[h, p1] += frac
    return U


def _pick_spatial_tile(hw_pad: int, cap: int = 512) -> int:
    """Largest multiple of 128 that divides hw_pad, capped (hw_pad % 128 == 0)."""
    best = 128
    t = 128
    while t <= min(hw_pad, cap):
        if hw_pad % t == 0:
            best = t
        t += 128
    return best


def _pick_channel_tile(c: int, cap: int = 512) -> int:
    """Largest divisor of c that is a multiple of 32 and <= cap, else full c."""
    best = c
    for t in range(32, min(c, cap) + 1, 32):
        if c % t == 0:
            best = t
    return best


# ---------------------------------------------------------------------------
# Kernels.
# ---------------------------------------------------------------------------
def _pool_kernel(x_ref, poolT_ref, pooled_ref, acc_ref):
    # x_ref:      (1, ct, thw)  activation tile, channels-first, HW flattened
    # poolT_ref:  (thw, PP)     adaptive-avg-pool operator tile (transposed)
    # pooled_ref: (1, ct, PP)   pooled^T output (f32)
    # acc_ref:    (ct, PP)      f32 accumulator (VMEM scratch)
    t = pl.program_id(2)

    @pl.when(t == 0)
    def _():
        acc_ref[...] = jnp.zeros_like(acc_ref)

    acc_ref[...] += jnp.dot(x_ref[0], poolT_ref[...],
                            preferred_element_type=jnp.float32)

    @pl.when(t == pl.num_programs(2) - 1)
    def _():
        pooled_ref[0] = acc_ref[...]


def _conv_up_kernel(pooled_ref, w_ref, bias_ref, upT_ref, o_ref):
    # pooled_ref: (1, Cin, PP) f32   w_ref: (Cout, Cin)   bias_ref: (Cout, PP) f32
    # upT_ref:    (PP, thw)          o_ref: (1, Cout, thw)
    pooled = pooled_ref[0].astype(w_ref.dtype)                       # tiny cast
    # 1x1 conv with BatchNorm folded into w/bias, then ReLU.
    y = jnp.dot(w_ref[...], pooled, preferred_element_type=jnp.float32)
    y = jnp.maximum(y + bias_ref[...], 0.0)                          # [Cout, PP]
    # Bilinear upsample (align_corners=True) as a matmul over this HW tile.
    out = jnp.dot(y.astype(upT_ref.dtype), upT_ref[...],
                  preferred_element_type=jnp.float32)                # [Cout, thw]
    o_ref[0] = out.astype(o_ref.dtype)


# ---------------------------------------------------------------------------
# Wrapper.
# ---------------------------------------------------------------------------
def psp_block(x_nchw, conv_w, gamma, beta, run_mean, run_var, pool_size,
              *, compute_dtype=jnp.bfloat16, eps=1e-5):
    B, Cin, H, W = x_nchw.shape
    Cout = conv_w.shape[0]
    P = pool_size
    HW, PP = H * W, P * P
    out_dtype = x_nchw.dtype

    # Spatial (lane) tiling; pad flattened HW up to a multiple of 128 if needed.
    HW_pad = -(-HW // 128) * 128
    thw = _pick_spatial_tile(HW_pad)
    n_t = HW_pad // thw
    ct = _pick_channel_tile(Cin)
    n_c = Cin // ct

    # Exact PyTorch pooling / bilinear operators, padded rows/cols are zero.
    pool_mat = np.kron(_adaptive_pool_matrix(H, P),
                       _adaptive_pool_matrix(W, P))                  # [PP, HW]
    up_mat = np.kron(_bilinear_matrix(H, P),
                     _bilinear_matrix(W, P))                         # [HW, PP]
    poolT_np = np.zeros((HW_pad, PP), np.float32)
    poolT_np[:HW] = pool_mat.T
    upT_np = np.zeros((PP, HW_pad), np.float32)
    upT_np[:, :HW] = up_mat.T
    poolT = jnp.asarray(poolT_np).astype(compute_dtype)
    upT = jnp.asarray(upT_np).astype(compute_dtype)

    # Fold BatchNorm2d (inference, running stats) into the 1x1 conv weight.
    w2d = conv_w.reshape(Cout, Cin).astype(jnp.float32)
    if P == 1:
        # pool_size == 1 => norm_layer replaced by nn.Identity in the module.
        w_fused = w2d
        bias = jnp.zeros((Cout,), jnp.float32)
    else:
        scale = gamma.astype(jnp.float32) * jax.lax.rsqrt(
            run_var.astype(jnp.float32) + eps)
        w_fused = w2d * scale[:, None]
        bias = beta.astype(jnp.float32) - run_mean.astype(jnp.float32) * scale
    w_fused = w_fused.astype(compute_dtype)
    bias_b = jnp.broadcast_to(bias[:, None], (Cout, PP)).astype(jnp.float32)

    # Channels-first flattened input: pure reshape, no transpose / HBM shuffle.
    x_flat = x_nchw.reshape(B, Cin, HW).astype(compute_dtype)
    if HW_pad != HW:
        x_flat = jnp.pad(x_flat, ((0, 0), (0, 0), (0, HW_pad - HW)))

    # ---- Stage 1: adaptive average pooling (reduction over HW tiles). ------
    pooledT = pl.pallas_call(
        _pool_kernel,
        out_shape=jax.ShapeDtypeStruct((B, Cin, PP), jnp.float32),
        grid_spec=pltpu.PrefetchScalarGridSpec(
            num_scalar_prefetch=0,
            grid=(B, n_c, n_t),
            in_specs=[
                pl.BlockSpec((1, ct, thw), lambda b, c, t: (b, c, t)),   # x
                pl.BlockSpec((thw, PP), lambda b, c, t: (t, 0)),         # POOL^T
            ],
            out_specs=pl.BlockSpec((1, ct, PP), lambda b, c, t: (b, c, 0)),
            scratch_shapes=[pltpu.VMEM((ct, PP), jnp.float32)],
        ),
        compiler_params=pltpu.CompilerParams(
            dimension_semantics=("parallel", "parallel", "arbitrary")),
    )(x_flat, poolT)

    # ---- Stage 2: conv(BN-folded) + ReLU + bilinear upsample (parallel). ---
    out_flat = pl.pallas_call(
        _conv_up_kernel,
        out_shape=jax.ShapeDtypeStruct((B, Cout, HW_pad), out_dtype),
        grid_spec=pl.GridSpec(
            grid=(B, n_t),
            in_specs=[
                pl.BlockSpec((1, Cin, PP), lambda b, t: (b, 0, 0)),      # pooled^T
                pl.BlockSpec((Cout, Cin), lambda b, t: (0, 0)),          # W'
                pl.BlockSpec((Cout, PP), lambda b, t: (0, 0)),           # bias
                pl.BlockSpec((PP, thw), lambda b, t: (0, t)),            # UP^T
            ],
            out_specs=pl.BlockSpec((1, Cout, thw), lambda b, t: (b, 0, t)),
        ),
        compiler_params=pltpu.CompilerParams(
            dimension_semantics=("parallel", "parallel")),
    )(pooledT, w_fused, bias_b, upT)

    if HW_pad != HW:
        out_flat = out_flat[:, :, :HW]
    return out_flat.reshape(B, Cout, H, W)


# ---------------------------------------------------------------------------
# Pure-JAX f32 reference of the same forward semantics (no Pallas).
# ---------------------------------------------------------------------------
def _reference(x, conv_w, gamma, beta, run_mean, run_var, P, eps=1e-5):
    B, Cin, H, W = x.shape
    Cout = conv_w.shape[0]
    Ah = jnp.asarray(_adaptive_pool_matrix(H, P))
    Aw = jnp.asarray(_adaptive_pool_matrix(W, P))
    Uh = jnp.asarray(_bilinear_matrix(H, P))
    Uw = jnp.asarray(_bilinear_matrix(W, P))
    pooled = jnp.einsum('ph,bchw,qw->bcpq', Ah, x, Aw)
    y = jnp.einsum('bcpq,dc->bdpq', pooled, conv_w.reshape(Cout, Cin))
    if P != 1:
        scale = gamma / jnp.sqrt(run_var + eps)
        y = (y - run_mean[None, :, None, None]) * scale[None, :, None, None] \
            + beta[None, :, None, None]
    y = jnp.maximum(y, 0.0)
    return jnp.einsum('hp,bdpq,wq->bdhw', Uh, y, Uw)


if __name__ == "__main__":
    B, Cin, Cout, H, W, P = 2, 4, 8, 16, 16, 2
    key = jax.random.PRNGKey(0)
    kx, kw, kg, kb, km, kv = jax.random.split(key, 6)

    x = jax.random.normal(kx, (B, Cin, H, W), jnp.float32)
    conv_w = 0.5 * jax.random.normal(kw, (Cout, Cin, 1, 1), jnp.float32)
    gamma = 1.0 + 0.1 * jax.random.normal(kg, (Cout,), jnp.float32)
    beta = 0.1 * jax.random.normal(kb, (Cout,), jnp.float32)
    run_mean = 0.1 * jax.random.normal(km, (Cout,), jnp.float32)
    run_var = jnp.abs(jax.random.normal(kv, (Cout,), jnp.float32)) + 0.5

    out = psp_block(x, conv_w, gamma, beta, run_mean, run_var, P)
    out = jax.block_until_ready(out)
    assert out.shape == (B, Cout, H, W), out.shape

    ref = _reference(x, conv_w, gamma, beta, run_mean, run_var, P)
    max_err = float(jnp.max(jnp.abs(out - ref)))
    # bf16 matmul operands (f32 accumulation) => loose-ish tolerance vs f32 ref.
    assert jnp.allclose(out, ref, rtol=3e-2, atol=3e-2), max_err

    print("KERNEL_OK")
</pallas_src>

<mosaic_0001>
module attributes {stable_mosaic.version = 11 : i64} {
  func.func @_pool_kernel(%arg0: i32, %arg1: i32, %arg2: i32, %arg3: memref<1x4x256xbf16, #tpu.memory_space<vmem>>, %arg4: memref<256x4xbf16, #tpu.memory_space<vmem>>, %arg5: memref<1x4x4xf32, #tpu.memory_space<vmem>>, %arg6: memref<4x4xf32, #tpu.memory_space<vmem>>) attributes {dimension_semantics = [#tpu.dimension_semantics<parallel>, #tpu.dimension_semantics<parallel>, #tpu.dimension_semantics<arbitrary>], iteration_bounds = array<i64: 2, 1, 1>, scalar_prefetch = 0 : i64, scratch_operands = 1 : i64, tpu.core_type = #tpu.core_type<tc>, window_params = [{transform_indices = @transform_0, window_bounds = array<i64: 1, 4, 256>}, {transform_indices = @transform_1, window_bounds = array<i64: 256, 4>}, {transform_indices = @transform_2, window_bounds = array<i64: 1, 4, 4>}]} {
    %c0_i32 = arith.constant 0 : i32
    %0 = arith.cmpi eq, %arg2, %c0_i32 : i32
    %1 = arith.extui %0 : i1 to i32
    %c0_i32_0 = arith.constant 0 : i32
    %2 = arith.cmpi ne, %1, %c0_i32_0 : i32
    scf.if %2 {
      %cst_11 = arith.constant 0.000000e+00 : f32
      %13 = vector.broadcast %cst_11 : f32 to vector<4x4xf32>
      %c0_12 = arith.constant 0 : index
      %c0_13 = arith.constant 0 : index
      %14 = vector.load %arg6[%c0_12, %c0_13] : memref<4x4xf32, #tpu.memory_space<vmem>>, vector<4x4xf32>
      tpu.vector_store %arg6[%c0_12, %c0_13], %13 {strides = array<i32>} : memref<4x4xf32, #tpu.memory_space<vmem>>, vector<4x4xf32>,
    } else {
    }
    %c0 = arith.constant 0 : index
    %c0_1 = arith.constant 0 : index
    %3 = vector.load %arg6[%c0, %c0_1] : memref<4x4xf32, #tpu.memory_space<vmem>>, vector<4x4xf32>
    %c0_2 = arith.constant 0 : index
    %c0_3 = arith.constant 0 : index
    %c0_4 = arith.constant 0 : index
    %4 = vector.load %arg3[%c0_2, %c0_3, %c0_4] : memref<1x4x256xbf16, #tpu.memory_space<vmem>>, vector<1x4x256xbf16>
    %5 = vector.shape_cast %4 : vector<1x4x256xbf16> to vector<4x256xbf16>
    %c0_5 = arith.constant 0 : index
    %c0_6 = arith.constant 0 : index
    %6 = vector.load %arg4[%c0_5, %c0_6] : memref<256x4xbf16, #tpu.memory_space<vmem>>, vector<256x4xbf16>
    %cst = arith.constant dense<0.000000e+00> : vector<4x4xf32>
    %7 = tpu.matmul %5, %6, %cst {dimension_numbers = #tpu.dot_dimension_numbers<[1], [0], [0], [1], [0, 0, 1, 1], [], []>} : vector<4x256xbf16>, vector<256x4xbf16>, vector<4x4xf32> -> vector<4x4xf32>
    %8 = arith.addf %3, %7 : vector<4x4xf32>
    %c0_7 = arith.constant 0 : index
    %c0_8 = arith.constant 0 : index
    %9 = vector.load %arg6[%c0_7, %c0_8] : memref<4x4xf32, #tpu.memory_space<vmem>>, vector<4x4xf32>
    tpu.vector_store %arg6[%c0_7, %c0_8], %8 {strides = array<i32>} : memref<4x4xf32, #tpu.memory_space<vmem>>, vector<4x4xf32>,
    %c0_i32_9 = arith.constant 0 : i32
    %10 = arith.cmpi eq, %arg2, %c0_i32_9 : i32
    %11 = arith.extui %10 : i1 to i32
    %c0_i32_10 = arith.constant 0 : i32
    %12 = arith.cmpi ne, %11, %c0_i32_10 : i32
    scf.if %12 {
      %c0_11 = arith.constant 0 : index
      %c0_12 = arith.constant 0 : index
      %13 = vector.load %arg6[%c0_11, %c0_12] : memref<4x4xf32, #tpu.memory_space<vmem>>, vector<4x4xf32>
      %c0_13 = arith.constant 0 : index
      %c0_14 = arith.constant 0 : index
      %c0_15 = arith.constant 0 : index
      %14 = vector.load %arg5[%c0_13, %c0_14, %c0_15] : memref<1x4x4xf32, #tpu.memory_space<vmem>>, vector<1x4x4xf32>
      %15 = vector.shape_cast %14 : vector<1x4x4xf32> to vector<4x4xf32>
      %16 = vector.shape_cast %13 : vector<4x4xf32> to vector<1x4x4xf32>
      tpu.vector_store %arg5[%c0_13, %c0_14, %c0_15], %16 {strides = array<i32>} : memref<1x4x4xf32, #tpu.memory_space<vmem>>, vector<1x4x4xf32>,
    } else {
    }
    return
  }
  func.func @transform_0(%arg0: i32, %arg1: i32, %arg2: i32) -> (i32, i32, i32) {
    %c0_i32 = arith.constant 0 : i32
    return %arg0, %arg1, %arg2 : i32, i32, i32
  }
  func.func @transform_1(%arg0: i32, %arg1: i32, %arg2: i32) -> (i32, i32) {
    %c0_i32 = arith.constant 0 : i32
    %c0_i32_0 = arith.constant 0 : i32
    return %arg2, %c0_i32 : i32, i32
  }
  func.func @transform_2(%arg0: i32, %arg1: i32, %arg2: i32) -> (i32, i32, i32) {
    %c0_i32 = arith.constant 0 : i32
    %c0_i32_0 = arith.constant 0 : i32
    return %arg0, %arg1, %c0_i32 : i32, i32, i32
  }
}

</mosaic_0001>

<llo_original>
// kernel: tpu_custom_call.1
$region0: #{tpu_custom_call.1}
  #allocation0 [shape = 'u32[]', space=smem, size = 0x4, offset = 0x4, fixed_abs, tag = 'smem constant byte address 0x4 - core index']
  #allocation1 [shape = 'u32[72,128]{1,0:T(1,128)}', space=vmem, size = 0x9000, scoped, tag = 'internal scratch']
  #allocation2 [shape = 'f32[4,4]{1,0:T(4,128)}', space=vmem, size = 0x800, scoped, tag = 'scratch operand']
  %s0 = inlined_call_operand.vmem [shape: bf16[2,4,256], index: 0, kind: input, shape index: {}]
  %s1 = inlined_call_operand.vmem [shape: bf16[256,4], index: 1, kind: input, shape index: {}]
  %s2 = inlined_call_operand.hbm [shape: f32[2,4,4], index: 2, kind: output, shape index: {}]
  %s3 = sld [smem:[#allocation0]]
  $region49: #{tpu_custom_call.1} parent=0
    _
  %s5 = ssub.s32 1, %s3
  %s6 = scalar_select 0, %s5, %s3
  $region1: #{tpu_custom_call.1} parent=0
    #allocation3 [shape = 'u8[4096]{0}', space=vmem, size = 0x1000, scoped, tag = 'output window, operand 0']
    #allocation4 [shape = 's32[2]{0}', space=sflag, size = 0x8, scoped, tag = 'scoped memory for tpu_custom_call.1']
    %7 = vsyncpa [#allocation4], 0
    %s8 = scalar_lea.sflag [#allocation4], 1
    %9 = vsyncpa %s8, 0
    loop: start=0, step=1, limit=4
    $region2: #{tpu_custom_call.1} parent=1 // loop_pre_header
      _
    $region3: #{tpu_custom_call.1} parent=1 // loop_header
      %s11 = sphi 0, %s15
      %p12 = scmp.ge.s32.totalorder %s11, 4
      %s18 = sphi 0, %s37
      %s19 = sphi 0, %s33
      %s20 = sphi 0, %s29
      %s21 = sphi 0, %s18
      %s22 = sphi 0, %s19
      %s23 = sphi 0, %s20
      %s24 = sphi 0, %s21
      %s25 = sphi 0, %s22
      %s26 = sphi 0, %s23
      %s44 = sphi 0, %s46
      %s47 = sphi 0, %s44
      %s48 = sphi 0, %s47
      %s64 = sphi 0, %s48
      %s70 = sphi 0, %s72
      %s73 = sphi 0, %s70
      %s74 = sphi 0, %s73
      %s90 = sphi 0, %s74
      %s98 = sphi 0, %s100
      %s101 = sphi 0, %s98
      %s102 = sphi 0, %s101
      %s118 = sphi 0, %s102
    $region4: #{tpu_custom_call.1} parent=1 // loop_header_branch
      %14 = sbr.rel (%p12) target = $region8
    $region5: #{tpu_custom_call.1} parent=1 // loop_body
      %s16 = ssub.s32 %s11, 1
      %s17 = ssub.s32 %s11, 2
      %s27 = sadd.s32 1, %s20
      %p28 = scmp.ge.s32.totalorder %s27, 1
      %s29 = scalar_select %p28, 0, %s27
      %s30 = sadd.s32 1, %s19
      %s31 = scalar_select %p28, %s30, %s19
      %p32 = scmp.ge.s32.totalorder %s31, 1
      %s33 = scalar_select %p32, 0, %s31
      %s34 = sadd.s32 1, %s18
      %s35 = scalar_select %p32, %s34, %s18
      %p36 = scmp.ge.s32.totalorder %s35, 2
      %s37 = scalar_select %p36, 0, %s35
      %s38 = ssub.s32 %s18, %s37
      %s39 = ssub.s32 %s19, %s33
      %s40 = sor.u32 %s38, %s39
      %s41 = ssub.s32 %s20, %s29
      %s42 = sor.u32 %s40, %s41
      %p43 = scmp.eq.s32.totalorder %s42, 0
      %s45 = sadd.s32 %s44, 1
      %s46 = scalar_select %p43, %s44, %s45
      %p49 = pneg %p43
      %p50 = scmp.eq.s32.totalorder %s11, 1
      %p51 = por %p49, %p50
      %p52 = scmp.ne.s32.totalorder %s44, %s47
      %p53 = scmp.eq.s32.totalorder %s11, 0
      %p54 = por %p52, %p53
      %p55 = scmp.ne.s32.totalorder %s44, %s47
      %p56 = scmp.eq.s32.totalorder %s16, 1
      %p57 = por %p55, %p56
      %p58 = scmp.ne.s32.totalorder %s47, %s48
      %p59 = scmp.eq.s32.totalorder %s16, 0
      %p60 = por %p58, %p59
      %p61 = scmp.ne.s32.totalorder %s47, %s48
      %p62 = scmp.eq.s32.totalorder %s17, 1
      %p63 = por %p61, %p62
      %p65 = scmp.ne.s32.totalorder %s48, %s64
      %p66 = scmp.eq.s32.totalorder %s17, 0
      %p67 = por %p65, %p66
      %s68 = ssub.s32 %s20, %s29
      %p69 = scmp.eq.s32.totalorder %s68, 0
      %s71 = sadd.s32 %s70, 1
      %s72 = scalar_select %p69, %s70, %s71
      %p75 = pneg %p69
      %p76 = scmp.eq.s32.totalorder %s11, 1
      %p77 = por %p75, %p76
      %p78 = scmp.ne.s32.totalorder %s70, %s73
      %p79 = scmp.eq.s32.totalorder %s11, 0
      %p80 = por %p78, %p79
      %p81 = scmp.ne.s32.totalorder %s70, %s73
      %p82 = scmp.eq.s32.totalorder %s16, 1
      %p83 = por %p81, %p82
      %p84 = scmp.ne.s32.totalorder %s73, %s74
      %p85 = scmp.eq.s32.totalorder %s16, 0
      %p86 = por %p84, %p85
      %p87 = scmp.ne.s32.totalorder %s73, %s74
      %p88 = scmp.eq.s32.totalorder %s17, 1
      %p89 = por %p87, %p88
      %p91 = scmp.ne.s32.totalorder %s74, %s90
      %p92 = scmp.eq.s32.totalorder %s17, 0
      %p93 = por %p91, %p92
      %s94 = ssub.s32 %s18, %s37
      %s95 = ssub.s32 %s19, %s33
      %s96 = sor.u32 %s94, %s95
      %p97 = scmp.eq.s32.totalorder %s96, 0
      %s99 = sadd.s32 %s98, 1
      %s100 = scalar_select %p97, %s98, %s99
      %p103 = pneg %p97
      %p104 = scmp.eq.s32.totalorder %s11, 1
      %p105 = por %p103, %p104
      %p106 = scmp.ne.s32.totalorder %s98, %s101
      %p107 = scmp.eq.s32.totalorder %s11, 0
      %p108 = por %p106, %p107
      %p109 = scmp.ne.s32.totalorder %s98, %s101
      %p110 = scmp.eq.s32.totalorder %s16, 1
      %p111 = por %p109, %p110
      %p112 = scmp.ne.s32.totalorder %s101, %s102
      %p113 = scmp.eq.s32.totalorder %s16, 0
      %p114 = por %p112, %p113
      %p115 = scmp.ne.s32.totalorder %s101, %s102
      %p116 = scmp.eq.s32.totalorder %s17, 1
      %p117 = por %p115, %p116
      %p119 = scmp.ne.s32.totalorder %s102, %s118
      %p120 = scmp.eq.s32.totalorder %s17, 0
      %p121 = por %p119, %p120
      %p122 = scmp.le.s32.totalorder 1, %s11
      %p123 = scmp.lt.s32.totalorder %s11, 3
      %p124 = pnand %p122, %p123
      %p125 = pneg %p124
      // Predicated region
      $region9: #{tpu_custom_call.1} parent=5 // pred_check
        _
      $region10: #{tpu_custom_call.1} parent=5 // pred_check_branch
        %127 = sbr.rel (%p124) target = $region12
      $region11: #{tpu_custom_call.1} parent=5 // pred_region
        %s128 = ssub.s32 %s11, 1
        // Predicated region
        $region13: #{tpu_custom_call.1} parent=11 // pred_check
          %p129 = pneg %p86
        $region14: #{tpu_custom_call.1} parent=11 // pred_check_branch
          %131 = sbr.rel (%p129) target = $region16
        $region15: #{tpu_custom_call.1} parent=11 // pred_region
          %s132 = smul.u32 32, %s23
          %p133 = scmp.lt.s32.totalorder %s132, 31
          %s134 = scalar_select %p133, %s132, 31
          %s135 = smul.addr %s134, 4
          %s136 = scalar_lea.vmem %s1, %s135
          %s137 = smul.u32 32, %s23
        $region16: #{tpu_custom_call.1} parent=11 // pred_fallthru
          _
      $region12: #{tpu_custom_call.1} parent=5 // pred_fallthru
        _
      %p138 = scmp.lt.s32.totalorder %s11, 2
      // Predicated region
      $region17: #{tpu_custom_call.1} parent=5 // pred_check
        %p139 = pneg %p138
      $region18: #{tpu_custom_call.1} parent=5 // pred_check_branch
        %141 = sbr.rel (%p139) target = $region20
      $region19: #{tpu_custom_call.1} parent=5 // pred_region
        // Predicated region
        $region21: #{tpu_custom_call.1} parent=19 // pred_check
          %p142 = pneg %p54
        $region22: #{tpu_custom_call.1} parent=19 // pred_check_branch
          %144 = sbr.rel (%p142) target = $region24
        $region23: #{tpu_custom_call.1} parent=19 // pred_region
          %s145 = smul.u32 2, %s20
          %p146 = scmp.lt.s32.totalorder %s18, 1
          %s147 = scalar_select %p146, %s18, 1
          %p148 = scmp.lt.s32.totalorder %s19, 0
          %s149 = scalar_select %p148, %s19, 0
          %p150 = scmp.lt.s32.totalorder %s145, 1
          %s151 = scalar_select %p150, %s145, 1
          %s152 = smul.addr %s149, 2
          %s153 = sadd.s32 %s151, %s152
          %s154 = smul.addr %s147, 2
          %s155 = sadd.s32 %s153, %s154
          %s156 = smul.addr %s155, 2
          %s157 = scalar_lea.vmem %s0, %s156
          %s158 = smul.u32 2, %s20
        $region24: #{tpu_custom_call.1} parent=19 // pred_fallthru
          _
      $region20: #{tpu_custom_call.1} parent=5 // pred_fallthru
        _
      %p159 = scmp.le.s32.totalorder 1, %s11
      %p160 = scmp.lt.s32.totalorder %s11, 3
      %p161 = pnand %p159, %p160
      %p162 = pneg %p161
      // Predicated region
      $region25: #{tpu_custom_call.1} parent=5 // pred_check
        _
      $region26: #{tpu_custom_call.1} parent=5 // pred_check_branch
        %164 = sbr.rel (%p161) target = $region28
      $region27: #{tpu_custom_call.1} parent=5 // pred_region
        %s165 = ssub.s32 %s11, 1
        %s166 = smul.u32 2, %s23
        %p167 = scmp.lt.s32.totalorder %s21, 1
        %s168 = scalar_select %p167, %s21, 1
        %p169 = scmp.lt.s32.totalorder %s22, 0
        %s170 = scalar_select %p169, %s22, 0
        %p171 = scmp.lt.s32.totalorder %s166, 1
        %s172 = scalar_select %p171, %s166, 1
        %s173 = smul.addr %s170, 2
        %s174 = sadd.s32 %s172, %s173
        %s175 = smul.addr %s168, 2
        %s176 = sadd.s32 %s174, %s175
        %s177 = smul.addr %s176, 2
        %s178 = scalar_lea.vmem %s0, %s177
        %p179 = pneg %p60
        %p180 = pneg %p57
        %s181 = smul.u32 32, %s23
        %p182 = scmp.lt.s32.totalorder %s181, 31
        %s183 = scalar_select %p182, %s181, 31
        %s184 = smul.addr %s183, 4
        %s185 = scalar_lea.vmem %s1, %s184
        %p186 = pneg %p86
        %p187 = pneg %p83
        %p188 = pneg %p114
        %p189 = pneg %p111
        %s190 = sand.u32 %s101, 1
        %s191 = scalar_lea.sflag [#allocation4], %s190
        %s192 = sand.u32 %s101, 1
        %s193 = smul.addr %s192, 4
        %s194 = scalar_lea.vmem [#allocation3], %s193
        %s195 = smul.u32 2, %s23
        %p196 = scmp.lt.s32.totalorder %s21, 1
        %s197 = scalar_select %p196, %s21, 1
        %p198 = scmp.lt.s32.totalorder %s22, 0
        %s199 = scalar_select %p198, %s22, 0
        %p200 = scmp.lt.s32.totalorder %s195, 1
        %s201 = scalar_select %p200, %s195, 1
        %s202 = smul.addr %s199, 2
        %s203 = sadd.s32 %s201, %s202
        %s204 = smul.addr %s197, 2
        %s205 = sadd.s32 %s203, %s204
        %s206 = smul.addr %s205, 2
        %s207 = scalar_lea.vmem %s0, %s206
        %s208 = smul.u32 2, %s23
        %s209 = smul.u32 32, %s23
        %p210 = scmp.lt.s32.totalorder %s209, 31
        %s211 = scalar_select %p210, %s209, 31
        %s212 = smul.addr %s211, 4
        %s213 = scalar_lea.vmem %s1, %s212
        %s214 = smul.u32 32, %s23
        %p215 = scmp.eq.s32.totalorder %s23, 0
        // Predicated region
        $region29: #{tpu_custom_call.1} parent=27 // pred_check
          %p216 = pneg %p215
        $region30: #{tpu_custom_call.1} parent=27 // pred_check_branch
          %218 = sbr.rel (%p216) target = $region32
        $region31: #{tpu_custom_call.1} parent=27 // pred_region
          %vm219 = vcmask 27648
          %220 = vst.msk [vmem:[#allocation2] sm:$0xf] %vm219, 0.0
        $region32: #{tpu_custom_call.1} parent=27 // pred_fallthru
          _
        %v221 = vld [vmem:[#allocation2] sm:$0xf]
        %v222 = vld [vmem:[%s207] sm:$0xf]
        %v223 = vld [vmem:[%s213] sm:$0xf]
        %v224 = vld [vmem:[%s213 + $0x4] sm:$0xf]
        %v225 = vld [vmem:[%s213 + $0x8] sm:$0xf]
        %v226 = vld [vmem:[%s213 + $0xc] sm:$0xf]
        %v227 = vld [vmem:[%s213 + $0x10] sm:$0xf]
        %v228 = vld [vmem:[%s213 + $0x14] sm:$0xf]
        %v229 = vld [vmem:[%s213 + $0x18] sm:$0xf]
        %v230 = vld [vmem:[%s213 + $0x1c] sm:$0xf]
        %v231 = vld [vmem:[%s213 + $0x20] sm:$0xf]
        %v232 = vld [vmem:[%s213 + $0x24] sm:$0xf]
        %v233 = vld [vmem:[%s213 + $0x28] sm:$0xf]
        %v234 = vld [vmem:[%s213 + $0x2c] sm:$0xf]
        %v235 = vld [vmem:[%s213 + $0x30] sm:$0xf]
        %v236 = vld [vmem:[%s213 + $0x34] sm:$0xf]
        %v237 = vld [vmem:[%s213 + $0x38] sm:$0xf]
        %v238 = vld [vmem:[%s213 + $0x3c] sm:$0xf]
        %v239 = vld [vmem:[%s213 + $0x40] sm:$0xf]
        %v240 = vld [vmem:[%s213 + $0x44] sm:$0xf]
        %v241 = vld [vmem:[%s213 + $0x48] sm:$0xf]
        %v242 = vld [vmem:[%s213 + $0x4c] sm:$0xf]
        %v243 = vld [vmem:[%s213 + $0x50] sm:$0xf]
        %v244 = vld [vmem:[%s213 + $0x54] sm:$0xf]
        %v245 = vld [vmem:[%s213 + $0x58] sm:$0xf]
        %v246 = vld [vmem:[%s213 + $0x5c] sm:$0xf]
        %v247 = vld [vmem:[%s213 + $0x60] sm:$0xf]
        %v248 = vld [vmem:[%s213 + $0x64] sm:$0xf]
        %v249 = vld [vmem:[%s213 + $0x68] sm:$0xf]
        %v250 = vld [vmem:[%s213 + $0x6c] sm:$0xf]
        %v251 = vld [vmem:[%s213 + $0x70] sm:$0xf]
        %v252 = vld [vmem:[%s213 + $0x74] sm:$0xf]
        %v253 = vld [vmem:[%s213 + $0x78] sm:$0xf]
        %v254 = vld [vmem:[%s213 + $0x7c] sm:$0xf]
        %256 = vst [vmem:[#allocation1] ss:$4 sm:$0xff] %v222
        %v257 = vld.sshfl [vmem:[#allocation1] sm:$0xff pattern:$0x73625140]
        %v258 = vld.sshfl [vmem:[#allocation1 + $0x8] sm:$0xff pattern:$0x73625140]
        %v293 = vunpack.c.l.b16 %v223
        %v294 = vunpack.c.l.b16 %v224
        %v295 = vunpack.c.l.b16 %v225
        %v296 = vunpack.c.l.b16 %v226
        %v297 = vunpack.c.l.b16 %v227
        %v298 = vunpack.c.l.b16 %v228
        %v299 = vunpack.c.l.b16 %v229
        %v300 = vunpack.c.l.b16 %v230
        %v301 = vunpack.c.l.b16 %v231
        %v302 = vunpack.c.l.b16 %v232
        %v303 = vunpack.c.l.b16 %v233
        %v304 = vunpack.c.l.b16 %v234
        %v305 = vunpack.c.l.b16 %v235
        %v306 = vunpack.c.l.b16 %v236
        %v307 = vunpack.c.l.b16 %v237
        %v308 = vunpack.c.l.b16 %v238
        %v309 = vunpack.c.l.b16 %v239
        %v310 = vunpack.c.l.b16 %v240
        %v311 = vunpack.c.l.b16 %v241
        %v312 = vunpack.c.l.b16 %v242
        %v313 = vunpack.c.l.b16 %v243
        %v314 = vunpack.c.l.b16 %v244
        %v315 = vunpack.c.l.b16 %v245
        %v316 = vunpack.c.l.b16 %v246
        %v317 = vunpack.c.l.b16 %v247
        %v318 = vunpack.c.l.b16 %v248
        %v319 = vunpack.c.l.b16 %v249
        %v320 = vunpack.c.l.b16 %v250
        %v321 = vunpack.c.l.b16 %v251
        %v322 = vunpack.c.l.b16 %v252
        %v323 = vunpack.c.l.b16 %v253
        %v324 = vunpack.c.l.b16 %v254
        %v325 = vpack.c.b16 %v294, %v293
        %v326 = vpack.c.b16 %v296, %v295
        %v327 = vpack.c.b16 %v298, %v297
        %v328 = vpack.c.b16 %v300, %v299
        %v329 = vpack.c.b16 %v302, %v301
        %v330 = vpack.c.b16 %v304, %v303
        %v331 = vpack.c.b16 %v306, %v305
        %v332 = vpack.c.b16 %v308, %v307
        %v333 = vpack.c.b16 %v310, %v309
        %v334 = vpack.c.b16 %v312, %v311
        %v335 = vpack.c.b16 %v314, %v313
        %v336 = vpack.c.b16 %v316, %v315
        %v337 = vpack.c.b16 %v318, %v317
        %v338 = vpack.c.b16 %v320, %v319
        %v339 = vpack.c.b16 %v322, %v321
        %v340 = vpack.c.b16 %v324, %v323
        %357 = vmatpush.bf16.msra.mxu0 %v332
        %358 = vmatpush.bf16.msra.mxu0 %v331
        %359 = vmatpush.bf16.msra.mxu0 %v330
        %360 = vmatpush.bf16.msra.mxu0 %v329
        %361 = vmatpush.bf16.msra.mxu0 %v328
        %362 = vmatpush.bf16.msra.mxu0 %v327
        %363 = vmatpush.bf16.msra.mxu0 %v326
        %364 = vmatpush.bf16.msra.mxu0 %v325
        %365 = vmatmul.bf16.gmra.mxu0 %v257
        %v366 = vpop.f32.mrf.mxu0
        %v367 = vadd.f32 0.0, %v366
        %v368 = vpop.f32.mrf.mxu0
        %369 = vdwg.mxu0
        %370 = vmatpush.bf16.msra.mxu0 %v340
        %371 = vmatpush.bf16.msra.mxu0 %v339
        %372 = vmatpush.bf16.msra.mxu0 %v338
        %373 = vmatpush.bf16.msra.mxu0 %v337
        %374 = vmatpush.bf16.msra.mxu0 %v336
        %375 = vmatpush.bf16.msra.mxu0 %v335
        %376 = vmatpush.bf16.msra.mxu0 %v334
        %377 = vmatpush.bf16.msra.mxu0 %v333
        %378 = vmatmul.bf16.gmra.mxu0 %v258
        %v379 = vpop.f32.mrf.mxu0
        %v380 = vadd.f32 %v367, %v379
        %v381 = vpop.f32.mrf.mxu0
        %382 = vdwg.mxu0
        %v383 = vadd.f32 %v221, %v380
        %vm384 = vcmask 27648
        %385 = vst.msk [vmem:[#allocation2] sm:$0xf] %vm384, %v383
        // Predicated region
        $region33: #{tpu_custom_call.1} parent=27 // pred_check
          %p386 = pneg %p215
        $region34: #{tpu_custom_call.1} parent=27 // pred_check_branch
          %388 = sbr.rel (%p386) target = $region36
        $region35: #{tpu_custom_call.1} parent=27 // pred_region
          %v389 = vld [vmem:[#allocation2] sm:$0xf]
          %390 = vst.msk [vmem:[%s194] sm:$0xf] %vm384, %v389
        $region36: #{tpu_custom_call.1} parent=27 // pred_fallthru
          _
        %s391 = sand.u32 %s101, 1
        %s392 = scalar_lea.sflag [#allocation4], %s391
        %s393 = sand.u32 %s101, 1
        %s394 = smul.addr %s393, 4
        %s395 = scalar_lea.vmem [#allocation3], %s394
        // Predicated region
        $region37: #{tpu_custom_call.1} parent=27 // pred_check
          %p396 = pneg %p111
        $region38: #{tpu_custom_call.1} parent=27 // pred_check_branch
          %398 = sbr.rel (%p396) target = $region40
        $region39: #{tpu_custom_call.1} parent=27 // pred_region
          %400 = vsyncadd %s392, 0
          %s401 = sadd.s32 %s22, %s21
          %s402 = smul.addr %s401, 4
          %s403 = scalar_lea.hbm %s2, %s402
          %s405 = sshll.u32 %s395, 4
          %s406 = int_to_ptr.vmem [resolvable:$true] %s405
          %s407 = sshll.u32 %s403, 4
          %s408 = int_to_ptr.hbm [resolvable:$true] %s407
          %410 = dma.vmem_to_hbm [thread:$0]  %s406, 64, %s408, %s392
        $region40: #{tpu_custom_call.1} parent=27 // pred_fallthru
          _
      $region28: #{tpu_custom_call.1} parent=5 // pred_fallthru
        _
      %p411 = scmp.le.s32.totalorder 2, %s11
      // Predicated region
      $region41: #{tpu_custom_call.1} parent=5 // pred_check
        %p412 = pneg %p411
      $region42: #{tpu_custom_call.1} parent=5 // pred_check_branch
        %414 = sbr.rel (%p412) target = $region44
      $region43: #{tpu_custom_call.1} parent=5 // pred_region
        %s415 = ssub.s32 %s11, 2
        // Predicated region
        $region45: #{tpu_custom_call.1} parent=43 // pred_check
          %p416 = pneg %p117
        $region46: #{tpu_custom_call.1} parent=43 // pred_check_branch
          %418 = sbr.rel (%p416) target = $region48
        $region47: #{tpu_custom_call.1} parent=43 // pred_region
          %s419 = sand.u32 %s102, 1
          %s420 = scalar_lea.sflag [#allocation4], %s419
          %s421 = sand.u32 %s102, 1
          %s422 = smul.addr %s421, 4
          %s423 = scalar_lea.vmem [#allocation3], %s422
          %425 = dma.done %s420, 64
        $region48: #{tpu_custom_call.1} parent=43 // pred_fallthru
          _
      $region44: #{tpu_custom_call.1} parent=5 // pred_fallthru
        _
    $region6: #{tpu_custom_call.1} parent=1 // loop_footer
      %s15 = sadd.s32 1, %s11
    $region7: #{tpu_custom_call.1} parent=1 // loop_footer_branch
      %10 = sbr.rel target = $region3
    $region8: #{tpu_custom_call.1} parent=1 // loop_exit
      _
    %426 = vsyncpa [#allocation4], 1
    %s427 = scalar_lea.sflag [#allocation4], 1
    %428 = vsyncpa %s427, 1

</llo_original>
